<compile_context>
chip_gen: v7x
topology: tpu7x:2x2x1
jax: 0.10.0
libtpu: 0.0.40
codegen_flags: <defaults>
</compile_context>

<pallas_src>
import numpy as np
import jax
import jax.numpy as jnp
from jax import lax
from jax.experimental import pallas as pl
from jax.experimental.pallas import tpu as pltpu

try:  # prefer scipy's LAP on the host; fall back to a pure-numpy Hungarian if unavailable.
    from scipy.optimize import linear_sum_assignment as _scipy_lsa
except Exception:  # pragma: no cover
    _scipy_lsa = None


# ----------------------------- Pallas kernel ---------------------------------
def _make_cost_kernel(squeezed):
    """Cost kernel. squeezed=True: refs are (N1,D), (D,N2p), (N1,N2p); else leading Bt dim."""

    def kernel(t1_ref, t2t_ref, cost_ref):
        x1 = t1_ref[...].astype(jnp.float32)    # (..., N1, D)
        x2t = t2t_ref[...].astype(jnp.float32)  # (..., D, N2p)  -- t2 pre-transposed

        def _l2norm(x, axis):
            ss = jnp.sum(x * x, axis=axis, keepdims=True)
            # F.normalize(p=2, eps=1e-12) clamps the *norm*, so clamp the squared sum at 1e-24.
            # Zero pad rows/columns stay exactly zero (0 * 1e12 = 0).
            return x * lax.rsqrt(jnp.maximum(ss, 1e-24))

        if squeezed:
            n1 = _l2norm(x1, 1).astype(jnp.bfloat16)    # (N1, D)
            n2t = _l2norm(x2t, 0).astype(jnp.bfloat16)  # (D, N2p), normalized over D
            cos = jnp.dot(n1, n2t, preferred_element_type=jnp.float32)       # (N1, N2p)
        else:
            n1 = _l2norm(x1, 2).astype(jnp.bfloat16)    # (Bt, N1, D)
            n2t = _l2norm(x2t, 1).astype(jnp.bfloat16)  # (Bt, D, N2p)
            cos = jnp.einsum("bnd,bdm->bnm", n1, n2t,
                             preferred_element_type=jnp.float32)             # (Bt, N1, N2p)

        cost_ref[...] = (1.0 - jnp.abs(cos)).astype(cost_ref.dtype)

    return kernel


def _soft_hungarian_cost_device(dense_t1, dense_t2):
    """Device-side cost computation. Returns (B, N1, N2) f32 cost matrices (un-padded)."""
    B, N1, D = dense_t1.shape
    Bb, N2, Dd = dense_t2.shape
    assert B == Bb and D == Dd, "query and document batches do not match"

    # Lane-dense t2 / cost blocks: pad the t2 token axis to a multiple of 128.
    N2p = -(-max(N2, 128) // 128) * 128
    # >=2 grid steps so both v7x TensorCores get work; more steps on larger batches for
    # pipeline overlap on single-TC v5e/v6e.
    B_pad = B + (B % 2)
    batch_tiles = next(t for t in (8, 4, 2, 1) if B_pad % t == 0)
    Bt = B_pad // batch_tiles
    squeezed = Bt == 1

    t1 = dense_t1
    if B_pad != B:
        t1 = jnp.pad(t1, ((0, B_pad - B), (0, 0), (0, 0)))
    # Pre-transpose t2 to (B_pad, D, N2p): plain A@B on the MXU (no in-kernel XLU transpose)
    # and a lane-dense input block.  Zero pad columns normalize to exactly zero -> cost 1.0,
    # and are sliced off below, so they never reach the host LAP solve.
    t2t = jnp.swapaxes(dense_t2, 1, 2)
    t2t = jnp.pad(t2t, ((0, B_pad - B), (0, 0), (0, N2p - N2)))

    lead = (pl.Squeezed(),) if squeezed else (Bt,)
    grid_spec = pltpu.PrefetchScalarGridSpec(
        num_scalar_prefetch=0,
        grid=(batch_tiles,),
        in_specs=[
            pl.BlockSpec(lead + (N1, D), lambda b: (b, 0, 0)),
            pl.BlockSpec(lead + (D, N2p), lambda b: (b, 0, 0)),
        ],
        out_specs=pl.BlockSpec(lead + (N1, N2p), lambda b: (b, 0, 0)),
    )
    cost_padded = pl.pallas_call(
        _make_cost_kernel(squeezed),
        out_shape=jax.ShapeDtypeStruct((B_pad, N1, N2p), jnp.float32),
        grid_spec=grid_spec,
        compiler_params=pltpu.CompilerParams(dimension_semantics=("parallel",)),
    )(t1, t2t)

    # Strip lane/batch padding on device so the device->host copy moves only the real bytes.
    return cost_padded[:B, :, :N2]


# Single jitted pipeline: pad + transpose fuse, only the un-padded cost leaves the device.
soft_hungarian_cost_device = jax.jit(_soft_hungarian_cost_device)


# --------------------- host-side Hungarian (LAP) ------------------------------
def _linear_sum_assignment_np(cost):
    """Fallback O(n^3) Hungarian (shortest augmenting path)."""
    cost = np.asarray(cost, dtype=np.float64)
    transposed = cost.shape[0] > cost.shape[1]
    if transposed:
        cost = cost.T
    n, m = cost.shape
    INF = float("inf")
    u = np.zeros(n + 1)
    v = np.zeros(m + 1)
    p = np.zeros(m + 1, dtype=np.int64)
    way = np.zeros(m + 1, dtype=np.int64)
    for i in range(1, n + 1):
        p[0] = i
        j0 = 0
        minv = np.full(m + 1, INF)
        used = np.zeros(m + 1, dtype=bool)
        while True:
            used[j0] = True
            i0 = p[j0]
            delta = INF
            j1 = -1
            for j in range(1, m + 1):
                if not used[j]:
                    cur = cost[i0 - 1, j - 1] - u[i0] - v[j]
                    if cur < minv[j]:
                        minv[j] = cur
                        way[j] = j0
                    if minv[j] < delta:
                        delta = minv[j]
                        j1 = j
            for j in range(m + 1):
                if used[j]:
                    u[p[j]] += delta
                    v[j] -= delta
                else:
                    minv[j] -= delta
            j0 = j1
            if p[j0] == 0:
                break
        while True:
            j1 = way[j0]
            p[j0] = p[j1]
            j0 = j1
            if j0 == 0:
                break
    col_for_row = np.zeros(n, dtype=np.int64)
    for j in range(1, m + 1):
        if p[j] != 0:
            col_for_row[p[j] - 1] = j - 1
    rows, cols = np.arange(n), col_for_row
    if transposed:
        rows, cols = cols, rows
        order = np.argsort(rows)
        rows, cols = rows[order], cols[order]
    return rows, cols


def _lsa(cost):
    if _scipy_lsa is not None:
        return _scipy_lsa(cost)
    return _linear_sum_assignment_np(cost)


# ----------------------------- forward wrapper --------------------------------
def soft_hungarian_forward(dense_t1, dense_t2, t1_mask=None, t2_mask=None):
    # Replicates the reference semantics when masks are *provided*: the `if t1_mask is None:`
    # branches never run, so the masks are ignored and the padded token sets are used as-is.
    del t1_mask, t2_mask
    # TODO(synk): GATConv is intentionally omitted — hungarian_distance never reads h1/h2, so
    # the message-passing outputs do not affect the module's returned distances.
    cost = soft_hungarian_cost_device(dense_t1, dense_t2)          # (B, N1, N2), un-padded
    cost_np = np.asarray(jax.block_until_ready(cost))              # single device->host copy
    B = cost_np.shape[0]
    dists = np.empty((B,), dtype=np.float32)
    for b in range(B):
        c = cost_np[b]
        # linear_sum_assignment is combinatorial; run on host like the torch reference.
        row, col = _lsa(c)
        dists[b] = c[row, col].mean()
    return jnp.asarray(dists)                                      # one host->device convert


# ----------------------------------- main --------------------------------------
if __name__ == "__main__":
    B, N1, N2, D = 2, 8, 8, 32
    key = jax.random.PRNGKey(0)
    k1, k2 = jax.random.split(key)

    dense_t1 = jax.random.normal(k1, (B, N1, D), jnp.float32)
    dense_t2 = jax.random.normal(k2, (B, N2, D), jnp.float32)
    t1_mask = jnp.ones((B, N1), dtype=bool)
    t2_mask = jnp.ones((B, N2), dtype=bool)

    out = soft_hungarian_forward(dense_t1, dense_t2, t1_mask, t2_mask)
    out = jax.block_until_ready(out)
    assert out.shape == (B,)

    # Correctness check vs. an f32 numpy reference.  Operands go through the MXU as bf16
    # (f32 accumulation), so use a bf16-level tolerance (elementwise cost error <= ~2^-8;
    # the LAP optimal-value error is bounded by the max elementwise cost error).
    x1 = np.asarray(dense_t1)
    x2 = np.asarray(dense_t2)
    n1 = x1 / np.maximum(np.linalg.norm(x1, axis=-1, keepdims=True), 1e-12)
    n2 = x2 / np.maximum(np.linalg.norm(x2, axis=-1, keepdims=True), 1e-12)
    cost_ref = 1.0 - np.abs(np.einsum("bnd,bmd->bnm", n1, n2))

    cost_pl = np.asarray(jax.block_until_ready(soft_hungarian_cost_device(dense_t1, dense_t2)))
    assert cost_pl.shape == (B, N1, N2)
    np.testing.assert_allclose(cost_pl, cost_ref, atol=2e-2, rtol=0)

    dists_ref = []
    for b in range(B):
        row, col = _lsa(cost_ref[b])
        dists_ref.append(cost_ref[b][row, col].mean())
    np.testing.assert_allclose(np.asarray(out), np.asarray(dists_ref, np.float32),
                               atol=2e-2, rtol=0)

    print("KERNEL_OK")
</pallas_src>

<mosaic_0001>
module attributes {stable_mosaic.version = 11 : i64} {
  func.func @kernel(%arg0: i32, %arg1: memref<1x8x32xf32, #tpu.memory_space<vmem>>, %arg2: memref<1x32x128xf32, #tpu.memory_space<vmem>>, %arg3: memref<1x8x128xf32, #tpu.memory_space<vmem>>) attributes {dimension_semantics = [#tpu.dimension_semantics<parallel>], iteration_bounds = array<i64: 2>, scalar_prefetch = 0 : i64, scratch_operands = 0 : i64, tpu.core_type = #tpu.core_type<tc>, window_params = [{transform_indices = @transform_0, window_bounds = array<i64: 1, 8, 32>}, {transform_indices = @transform_1, window_bounds = array<i64: 1, 32, 128>}, {transform_indices = @transform_2, window_bounds = array<i64: 1, 8, 128>}]} {
    %c0 = arith.constant 0 : index
    %c0_0 = arith.constant 0 : index
    %c0_1 = arith.constant 0 : index
    %0 = vector.load %arg1[%c0, %c0_0, %c0_1] : memref<1x8x32xf32, #tpu.memory_space<vmem>>, vector<1x8x32xf32>
    %1 = vector.shape_cast %0 : vector<1x8x32xf32> to vector<8x32xf32>
    %c0_2 = arith.constant 0 : index
    %c0_3 = arith.constant 0 : index
    %c0_4 = arith.constant 0 : index
    %2 = vector.load %arg2[%c0_2, %c0_3, %c0_4] : memref<1x32x128xf32, #tpu.memory_space<vmem>>, vector<1x32x128xf32>
    %3 = vector.shape_cast %2 : vector<1x32x128xf32> to vector<32x128xf32>
    %4 = arith.mulf %1, %1 : vector<8x32xf32>
    %cst = arith.constant dense<0.000000e+00> : vector<8xf32>
    %5 = vector.multi_reduction <add>, %4, %cst [1] : vector<8x32xf32> to vector<8xf32>
    %6 = vector.shape_cast %5 : vector<8xf32> to vector<8x1xf32>
    %cst_5 = arith.constant 1.000000e-24 : f32
    %7 = vector.broadcast %cst_5 : f32 to vector<8x1xf32>
    %8 = arith.maximumf %6, %7 : vector<8x1xf32>
    %9 = math.rsqrt %8 : vector<8x1xf32>
    %10 = vector.broadcast %9 : vector<8x1xf32> to vector<8x32xf32>
    %11 = arith.mulf %1, %10 : vector<8x32xf32>
    %12 = arith.truncf %11 : vector<8x32xf32> to vector<8x32xbf16>
    %13 = arith.mulf %3, %3 : vector<32x128xf32>
    %cst_6 = arith.constant dense<0.000000e+00> : vector<128xf32>
    %14 = vector.multi_reduction <add>, %13, %cst_6 [0] : vector<32x128xf32> to vector<128xf32>
    %15 = vector.shape_cast %14 : vector<128xf32> to vector<1x128xf32>
    %cst_7 = arith.constant 1.000000e-24 : f32
    %16 = vector.broadcast %cst_7 : f32 to vector<1x128xf32>
    %17 = arith.maximumf %15, %16 : vector<1x128xf32>
    %18 = math.rsqrt %17 : vector<1x128xf32>
    %19 = vector.broadcast %18 : vector<1x128xf32> to vector<32x128xf32>
    %20 = arith.mulf %3, %19 : vector<32x128xf32>
    %21 = arith.truncf %20 : vector<32x128xf32> to vector<32x128xbf16>
    %cst_8 = arith.constant dense<0.000000e+00> : vector<8x128xf32>
    %22 = tpu.matmul %12, %21, %cst_8 {dimension_numbers = #tpu.dot_dimension_numbers<[1], [0], [0], [1], [0, 0, 1, 1], [], []>} : vector<8x32xbf16>, vector<32x128xbf16>, vector<8x128xf32> -> vector<8x128xf32>
    %23 = math.absf %22 : vector<8x128xf32>
    %cst_9 = arith.constant 1.000000e+00 : f32
    %24 = vector.broadcast %cst_9 : f32 to vector<8x128xf32>
    %25 = arith.subf %24, %23 : vector<8x128xf32>
    %c0_10 = arith.constant 0 : index
    %c0_11 = arith.constant 0 : index
    %c0_12 = arith.constant 0 : index
    %26 = vector.load %arg3[%c0_10, %c0_11, %c0_12] : memref<1x8x128xf32, #tpu.memory_space<vmem>>, vector<1x8x128xf32>
    %27 = vector.shape_cast %26 : vector<1x8x128xf32> to vector<8x128xf32>
    %28 = vector.shape_cast %25 : vector<8x128xf32> to vector<1x8x128xf32>
    tpu.vector_store %arg3[%c0_10, %c0_11, %c0_12], %28 {strides = array<i32>} : memref<1x8x128xf32, #tpu.memory_space<vmem>>, vector<1x8x128xf32>,
    return
  }
  func.func @transform_0(%arg0: i32) -> (i32, i32, i32) {
    %c0_i32 = arith.constant 0 : i32
    %c0_i32_0 = arith.constant 0 : i32
    %c0_i32_1 = arith.constant 0 : i32
    return %arg0, %c0_i32, %c0_i32_0 : i32, i32, i32
  }
  func.func @transform_1(%arg0: i32) -> (i32, i32, i32) {
    %c0_i32 = arith.constant 0 : i32
    %c0_i32_0 = arith.constant 0 : i32
    %c0_i32_1 = arith.constant 0 : i32
    return %arg0, %c0_i32, %c0_i32_0 : i32, i32, i32
  }
  func.func @transform_2(%arg0: i32) -> (i32, i32, i32) {
    %c0_i32 = arith.constant 0 : i32
    %c0_i32_0 = arith.constant 0 : i32
    %c0_i32_1 = arith.constant 0 : i32
    return %arg0, %c0_i32, %c0_i32_0 : i32, i32, i32
  }
}

</mosaic_0001>

<llo_original>
// kernel: _soft_hungarian_cost_device.1
$region0: #{_soft_hungarian_cost_device.1}
  #allocation0 [shape = 'u32[]', space=smem, size = 0x4, offset = 0x4, fixed_abs, tag = 'smem constant byte address 0x4 - core index']
  #allocation1 [shape = 'u32[144,128]{1,0:T(1,128)}', space=vmem, size = 0x12000, scoped, tag = 'internal scratch']
  %s0 = inlined_call_operand.vmem [shape: f32[2,8,32], index: 0, kind: input, shape index: {}]
  %s1 = inlined_call_operand.vmem [shape: f32[2,32,128], index: 1, kind: input, shape index: {}]
  %s2 = inlined_call_operand.hbm [shape: f32[2,8,128], index: 2, kind: output, shape index: {}]
  %s3 = sld [smem:[#allocation0]]
  $region41: #{_soft_hungarian_cost_device.1} parent=0
    _
  %s5 = ssub.s32 1, %s3
  %s6 = scalar_select 0, %s5, %s3
  $region1: #{_soft_hungarian_cost_device.1} parent=0
    #allocation2 [shape = 'u8[8192]{0}', space=vmem, size = 0x2000, scoped, tag = 'output window, operand 0']
    #allocation3 [shape = 's32[2]{0}', space=sflag, size = 0x8, scoped, tag = 'scoped memory for _soft_hungarian_cost_device.1']
    %7 = vsyncpa [#allocation3], 0
    %s8 = scalar_lea.sflag [#allocation3], 1
    %9 = vsyncpa %s8, 0
    loop: start=0, step=1, limit=4
    $region2: #{_soft_hungarian_cost_device.1} parent=1 // loop_pre_header
      _
    $region3: #{_soft_hungarian_cost_device.1} parent=1 // loop_header
      %s11 = sphi 0, %s15
      %p12 = scmp.ge.s32.totalorder %s11, 4
      %s21 = sphi 0, %s23
      %s24 = sphi 0, %s21
      %s25 = sphi 0, %s24
      %s41 = sphi 0, %s25
      %s47 = sphi 0, %s49
      %s50 = sphi 0, %s47
      %s51 = sphi 0, %s50
      %s67 = sphi 0, %s51
      %s73 = sphi 0, %s75
      %s76 = sphi 0, %s73
      %s77 = sphi 0, %s76
      %s93 = sphi 0, %s77
    $region4: #{_soft_hungarian_cost_device.1} parent=1 // loop_header_branch
      %14 = sbr.rel (%p12) target = $region8
    $region5: #{_soft_hungarian_cost_device.1} parent=1 // loop_body
      %s16 = ssub.s32 %s11, 1
      %s17 = ssub.s32 %s11, 2
      %s18 = sadd.s32 %s11, 1
      %s19 = ssub.s32 %s11, %s18
      %p20 = scmp.eq.s32.totalorder %s19, 0
      %s22 = sadd.s32 %s21, 1
      %s23 = scalar_select %p20, %s21, %s22
      %p26 = pneg %p20
      %p27 = scmp.eq.s32.totalorder %s11, 1
      %p28 = por %p26, %p27
      %p29 = scmp.ne.s32.totalorder %s21, %s24
      %p30 = scmp.eq.s32.totalorder %s11, 0
      %p31 = por %p29, %p30
      %p32 = scmp.ne.s32.totalorder %s21, %s24
      %p33 = scmp.eq.s32.totalorder %s16, 1
      %p34 = por %p32, %p33
      %p35 = scmp.ne.s32.totalorder %s24, %s25
      %p36 = scmp.eq.s32.totalorder %s16, 0
      %p37 = por %p35, %p36
      %p38 = scmp.ne.s32.totalorder %s24, %s25
      %p39 = scmp.eq.s32.totalorder %s17, 1
      %p40 = por %p38, %p39
      %p42 = scmp.ne.s32.totalorder %s25, %s41
      %p43 = scmp.eq.s32.totalorder %s17, 0
      %p44 = por %p42, %p43
      %s45 = ssub.s32 %s11, %s18
      %p46 = scmp.eq.s32.totalorder %s45, 0
      %s48 = sadd.s32 %s47, 1
      %s49 = scalar_select %p46, %s47, %s48
      %p52 = pneg %p46
      %p53 = scmp.eq.s32.totalorder %s11, 1
      %p54 = por %p52, %p53
      %p55 = scmp.ne.s32.totalorder %s47, %s50
      %p56 = scmp.eq.s32.totalorder %s11, 0
      %p57 = por %p55, %p56
      %p58 = scmp.ne.s32.totalorder %s47, %s50
      %p59 = scmp.eq.s32.totalorder %s16, 1
      %p60 = por %p58, %p59
      %p61 = scmp.ne.s32.totalorder %s50, %s51
      %p62 = scmp.eq.s32.totalorder %s16, 0
      %p63 = por %p61, %p62
      %p64 = scmp.ne.s32.totalorder %s50, %s51
      %p65 = scmp.eq.s32.totalorder %s17, 1
      %p66 = por %p64, %p65
      %p68 = scmp.ne.s32.totalorder %s51, %s67
      %p69 = scmp.eq.s32.totalorder %s17, 0
      %p70 = por %p68, %p69
      %s71 = ssub.s32 %s11, %s18
      %p72 = scmp.eq.s32.totalorder %s71, 0
      %s74 = sadd.s32 %s73, 1
      %s75 = scalar_select %p72, %s73, %s74
      %p78 = pneg %p72
      %p79 = scmp.eq.s32.totalorder %s11, 1
      %p80 = por %p78, %p79
      %p81 = scmp.ne.s32.totalorder %s73, %s76
      %p82 = scmp.eq.s32.totalorder %s11, 0
      %p83 = por %p81, %p82
      %p84 = scmp.ne.s32.totalorder %s73, %s76
      %p85 = scmp.eq.s32.totalorder %s16, 1
      %p86 = por %p84, %p85
      %p87 = scmp.ne.s32.totalorder %s76, %s77
      %p88 = scmp.eq.s32.totalorder %s16, 0
      %p89 = por %p87, %p88
      %p90 = scmp.ne.s32.totalorder %s76, %s77
      %p91 = scmp.eq.s32.totalorder %s17, 1
      %p92 = por %p90, %p91
      %p94 = scmp.ne.s32.totalorder %s77, %s93
      %p95 = scmp.eq.s32.totalorder %s17, 0
      %p96 = por %p94, %p95
      %p97 = scmp.le.s32.totalorder 1, %s11
      %p98 = scmp.lt.s32.totalorder %s11, 3
      %p99 = pnand %p97, %p98
      %p100 = pneg %p99
      // Predicated region
      $region9: #{_soft_hungarian_cost_device.1} parent=5 // pred_check
        _
      $region10: #{_soft_hungarian_cost_device.1} parent=5 // pred_check_branch
        %102 = sbr.rel (%p99) target = $region12
      $region11: #{_soft_hungarian_cost_device.1} parent=5 // pred_region
        %s103 = ssub.s32 %s11, 1
      $region12: #{_soft_hungarian_cost_device.1} parent=5 // pred_fallthru
        _
      %p104 = scmp.lt.s32.totalorder %s11, 2
      // Predicated region
      $region13: #{_soft_hungarian_cost_device.1} parent=5 // pred_check
        %p105 = pneg %p104
      $region14: #{_soft_hungarian_cost_device.1} parent=5 // pred_check_branch
        %107 = sbr.rel (%p105) target = $region16
      $region15: #{_soft_hungarian_cost_device.1} parent=5 // pred_region
        // Predicated region
        $region17: #{_soft_hungarian_cost_device.1} parent=15 // pred_check
          %p108 = pneg %p31
        $region18: #{_soft_hungarian_cost_device.1} parent=15 // pred_check_branch
          %110 = sbr.rel (%p108) target = $region20
        $region19: #{_soft_hungarian_cost_device.1} parent=15 // pred_region
          %p111 = scmp.lt.s32.totalorder %s11, 1
          %s112 = scalar_select %p111, %s11, 1
          %s113 = smul.addr %s112, 8
          %s114 = scalar_lea.vmem %s0, %s113
        $region20: #{_soft_hungarian_cost_device.1} parent=15 // pred_fallthru
          _
        // Predicated region
        $region21: #{_soft_hungarian_cost_device.1} parent=15 // pred_check
          %p115 = pneg %p57
        $region22: #{_soft_hungarian_cost_device.1} parent=15 // pred_check_branch
          %117 = sbr.rel (%p115) target = $region24
        $region23: #{_soft_hungarian_cost_device.1} parent=15 // pred_region
          %p118 = scmp.lt.s32.totalorder %s11, 1
          %s119 = scalar_select %p118, %s11, 1
          %s120 = smul.addr %s119, 4
          %s121 = smul.addr %s120, 8
          %s122 = scalar_lea.vmem %s1, %s121
        $region24: #{_soft_hungarian_cost_device.1} parent=15 // pred_fallthru
          _
      $region16: #{_soft_hungarian_cost_device.1} parent=5 // pred_fallthru
        _
      %p123 = scmp.le.s32.totalorder 1, %s11
      %p124 = scmp.lt.s32.totalorder %s11, 3
      %p125 = pnand %p123, %p124
      %p126 = pneg %p125
      // Predicated region
      $region25: #{_soft_hungarian_cost_device.1} parent=5 // pred_check
        _
      $region26: #{_soft_hungarian_cost_device.1} parent=5 // pred_check_branch
        %128 = sbr.rel (%p125) target = $region28
      $region27: #{_soft_hungarian_cost_device.1} parent=5 // pred_region
        %s129 = ssub.s32 %s11, 1
        %p130 = scmp.lt.s32.totalorder %s16, 1
        %s131 = scalar_select %p130, %s16, 1
        %s132 = smul.addr %s131, 8
        %s133 = scalar_lea.vmem %s0, %s132
        %p134 = pneg %p37
        %p135 = pneg %p34
        %p136 = scmp.lt.s32.totalorder %s16, 1
        %s137 = scalar_select %p136, %s16, 1
        %s138 = smul.addr %s137, 4
        %s139 = smul.addr %s138, 8
        %s140 = scalar_lea.vmem %s1, %s139
        %p141 = pneg %p63
        %p142 = pneg %p60
        %p143 = pneg %p89
        %p144 = pneg %p86
        %s145 = sand.u32 %s76, 1
        %s146 = scalar_lea.sflag [#allocation3], %s145
        %s147 = sand.u32 %s76, 1
        %s148 = smul.addr %s147, 8
        %s149 = scalar_lea.vmem [#allocation2], %s148
        %p150 = scmp.lt.s32.totalorder %s16, 1
        %s151 = scalar_select %p150, %s16, 1
        %s152 = smul.addr %s151, 8
        %s153 = scalar_lea.vmem %s0, %s152
        %p154 = scmp.lt.s32.totalorder %s16, 1
        %s155 = scalar_select %p154, %s16, 1
        %s156 = smul.addr %s155, 4
        %s157 = smul.addr %s156, 8
        %s158 = scalar_lea.vmem %s1, %s157
        %v160 = vld [vmem:[%s153] sm:$0xff]
        %v161 = vld [vmem:[%s158] sm:$0xff]
        %v162 = vld [vmem:[%s158 + $0x8] sm:$0xff]
        %v163 = vld [vmem:[%s158 + $0x10] sm:$0xff]
        %v164 = vld [vmem:[%s158 + $0x18] sm:$0xff]
        %v165 = vmul.f32 %v160, %v160
        %vm166 = vcmask 261120
        %v167 = vsel %vm166, %v165, 0.0
        %168 = vadd.xlane.f32.xlu0 %v167
        %v169 = vpop.xlane.xlu0 %168
        %v170 = vmax.f32 %v169, 1e-24
        %v171 = vrsqrt.pop %v170
        %v172 = vmul.f32 %v160, %v171
        %v173 = vpack.c.bf16 %v172, %v172
        %v174 = vmul.f32 %v161, %v161
        %v175 = vmul.f32 %v162, %v162
        %v176 = vmul.f32 %v163, %v163
        %v177 = vmul.f32 %v164, %v164
        %v178 = vadd.f32 %v174, %v175
        %v179 = vadd.f32 %v178, %v176
        %v180 = vadd.f32 %v179, %v177
        %v181 = vrot.slane %v180, 4
        %v182 = vadd.f32 %v180, %v181
        %v183 = vrot.slane %v182, 2
        %v184 = vadd.f32 %v182, %v183
        %v185 = vrot.slane %v184, 1
        %v186 = vadd.f32 %v184, %v185
        %v187 = vmax.f32 %v186, 1e-24
        %v188 = vrsqrt.pop %v187
        %v189 = vmul.f32 %v161, %v188
        %v190 = vmul.f32 %v162, %v188
        %v191 = vmul.f32 %v163, %v188
        %v192 = vmul.f32 %v164, %v188
        %v193 = vpack.c.bf16 %v190, %v189
        %v194 = vpack.c.bf16 %v192, %v191
        %v196 = vsel %vm166, %v173, 0
        %198 = vmatprep.subr.bf16.mxu0 0
        %199 = vmatpush1.bf16.msra.mxu0 %v193
        %200 = vmatprep.subr.bf16.mxu0 0
        %201 = vmatpush1.bf16.msra.mxu0 %v194
        %202 = vmatprep.subr.bf16.mxu0 0
        %203 = vmatpush1.bf16.msra.mxu0 0
        %204 = vmatprep.subr.bf16.mxu0 0
        %205 = vmatpush1.bf16.msra.mxu0 0
        %206 = vmatprep.subr.bf16.mxu0 0
        %207 = vmatpush1.bf16.msra.mxu0 0
        %208 = vmatprep.subr.bf16.mxu0 0
        %209 = vmatpush1.bf16.msra.mxu0 0
        %210 = vmatprep.subr.bf16.mxu0 0
        %211 = vmatpush1.bf16.msra.mxu0 0
        %212 = vmatprep.subr.bf16.mxu0 0
        %213 = vmatpush1.bf16.msra.mxu0 0
        %214 = vmatprep.subr.bf16.mxu0 0
        %215 = vmatpush1.bf16.msra.mxu0 0
        %216 = vmatprep.subr.bf16.mxu0 0
        %217 = vmatpush1.bf16.msra.mxu0 0
        %218 = vmatprep.subr.bf16.mxu0 0
        %219 = vmatpush1.bf16.msra.mxu0 0
        %220 = vmatprep.subr.bf16.mxu0 0
        %221 = vmatpush1.bf16.msra.mxu0 0
        %222 = vmatprep.subr.bf16.mxu0 0
        %223 = vmatpush1.bf16.msra.mxu0 0
        %224 = vmatprep.subr.bf16.mxu0 0
        %225 = vmatpush1.bf16.msra.mxu0 0
        %226 = vmatprep.subr.bf16.mxu0 0
        %227 = vmatpush1.bf16.msra.mxu0 0
        %228 = vmatprep.subr.bf16.mxu0 0
        %229 = vmatpush1.bf16.msra.mxu0 0
        %230 = vmatprep.mubr.bf16.mxu0 0
        %231 = vmatmul.mubr.bf16.gmra.mrb[0].mxu0 %v196
        %v232 = vpop.f32.mrb[0].mxu0
        %v233 = vadd.f32 0.0, %v232
        %v234 = vpop.f32.mrb[0].mxu0
        %v235 = vpop.f32.mrb[0].mxu0
        %v236 = vpop.f32.mrb[0].mxu0
        %237 = vdwg.mxu0
        %v238 = vand.u32 2147483647, %v233
        %v239 = vsub.f32 1.0, %v238
        %240 = vst [vmem:[%s149] sm:$0xff] %v239
        %s241 = sand.u32 %s76, 1
        %s242 = scalar_lea.sflag [#allocation3], %s241
        %s243 = sand.u32 %s76, 1
        %s244 = smul.addr %s243, 8
        %s245 = scalar_lea.vmem [#allocation2], %s244
        // Predicated region
        $region29: #{_soft_hungarian_cost_device.1} parent=27 // pred_check
          %p246 = pneg %p86
        $region30: #{_soft_hungarian_cost_device.1} parent=27 // pred_check_branch
          %248 = sbr.rel (%p246) target = $region32
        $region31: #{_soft_hungarian_cost_device.1} parent=27 // pred_region
          %s250 = ssub.s32 128, 128
          %251 = vsyncadd %s242, %s250
          %s252 = smul.addr %s16, 128
          %s253 = scalar_lea.hbm %s2, %s252
          %s255 = sshll.u32 %s245, 4
          %s256 = int_to_ptr.vmem [resolvable:$true] %s255
          %258 = dma.vmem_to_hbm [thread:$0]  %s256, 128, %s253, %s242
        $region32: #{_soft_hungarian_cost_device.1} parent=27 // pred_fallthru
          _
      $region28: #{_soft_hungarian_cost_device.1} parent=5 // pred_fallthru
        _
      %p259 = scmp.le.s32.totalorder 2, %s11
      // Predicated region
      $region33: #{_soft_hungarian_cost_device.1} parent=5 // pred_check
        %p260 = pneg %p259
      $region34: #{_soft_hungarian_cost_device.1} parent=5 // pred_check_branch
        %262 = sbr.rel (%p260) target = $region36
      $region35: #{_soft_hungarian_cost_device.1} parent=5 // pred_region
        %s263 = ssub.s32 %s11, 2
        // Predicated region
        $region37: #{_soft_hungarian_cost_device.1} parent=35 // pred_check
          %p264 = pneg %p92
        $region38: #{_soft_hungarian_cost_device.1} parent=35 // pred_check_branch
          %266 = sbr.rel (%p264) target = $region40
        $region39: #{_soft_hungarian_cost_device.1} parent=35 // pred_region
          %s267 = sand.u32 %s77, 1
          %s268 = scalar_lea.sflag [#allocation3], %s267
          %s269 = sand.u32 %s77, 1
          %s270 = smul.addr %s269, 8
          %s271 = scalar_lea.vmem [#allocation2], %s270
          %272 = dma.done %s268, 128
        $region40: #{_soft_hungarian_cost_device.1} parent=35 // pred_fallthru
          _
      $region36: #{_soft_hungarian_cost_device.1} parent=5 // pred_fallthru
        _
    $region6: #{_soft_hungarian_cost_device.1} parent=1 // loop_footer
      %s15 = sadd.s32 1, %s11
    $region7: #{_soft_hungarian_cost_device.1} parent=1 // loop_footer_branch
      %10 = sbr.rel target = $region3
    $region8: #{_soft_hungarian_cost_device.1} parent=1 // loop_exit
      _
    %273 = vsyncpa [#allocation3], 1
    %s274 = scalar_lea.sflag [#allocation3], 1
    %275 = vsyncpa %s274, 1

</llo_original>
